<compile_context>
chip_gen: v5e
topology: v5e:2x2
jax: 0.10.0
libtpu: 0.0.40
codegen_flags: <defaults>
</compile_context>

<pallas_src>
import functools

import jax
import jax.numpy as jnp
from jax.experimental import pallas as pl
from jax.experimental.pallas import tpu as pltpu


_LANE = 128
_COL_CANDIDATES = (32768, 16384, 8192, 4096, 2048, 1024, 512, 256, 128)


def _signed_sqrt(y):
    """sign(y) * sqrt(|y|).

    f32: sign-bit splice (bitcast + and/or) — avoids the compare/select/mul
    chain that sign() lowers to; sqrt itself rides the EUP slot.
    Other float dtypes (bf16 compute on v6e/v7x): abs + sqrt + conditional
    negate, which stays native-width.
    """
    if y.dtype == jnp.float32:
        bits = pltpu.bitcast(y, jnp.uint32)
        mag = pltpu.bitcast(bits & jnp.uint32(0x7FFFFFFF), jnp.float32)
        root = jnp.sqrt(mag)
        root_bits = pltpu.bitcast(root, jnp.uint32) | (bits & jnp.uint32(0x80000000))
        return pltpu.bitcast(root_bits, jnp.float32)
    root = jnp.sqrt(jnp.abs(y))
    return jnp.where(y < 0, -root, root)


def _transform_kernel(params_ref, x_ref, o_ref, *, method, compute_dtype):
    """Elementwise hot path.  params_ref (SMEM): [scale, offset] (f32)."""
    scale = params_ref[0].astype(compute_dtype)
    offset = params_ref[1].astype(compute_dtype)
    y = x_ref[...].astype(compute_dtype) * scale + offset
    if method in ("none", "identity"):
        pass
    elif method == "sqrt":
        y = _signed_sqrt(y)
    else:
        raise NotImplementedError(
            "Transformation {} is not supported!".format(method))
    o_ref[...] = y.astype(o_ref.dtype)


def _hw_config():
    """Return (block_bytes, vmem_limit_bytes) tuned per TPU generation.

    in + out, each double-buffered => ~4x block_bytes resident in VMEM.
    v5e/v6e have 128 MiB physical VMEM -> 8 MiB blocks under a 48 MiB limit.
    v7x has only 64 MiB per TC -> 6 MiB blocks under a 40 MiB limit (also the
    conservative default if the query is unavailable).
    """
    vmem = None
    try:
        vmem = getattr(pltpu.get_tpu_info(), "vmem_capacity_bytes", None)
    except Exception:
        vmem = None
    if vmem is not None and vmem >= 96 * 1024 * 1024:
        return 8 * 1024 * 1024, 48 << 20
    return 6 * 1024 * 1024, 40 << 20


def _compute_dtype(x_dtype):
    """bf16 compute on chips with native bf16 VALU/EUP (v6e/v7x), else f32."""
    if x_dtype == jnp.bfloat16:
        try:
            kind = jax.devices()[0].device_kind.lower()
        except Exception:
            kind = ""
        if any(tag in kind for tag in ("v2", "v3", "v4", "v5")):
            return jnp.float32
        return jnp.bfloat16
    return jnp.float32


def transform_forward(x, method="identity", scale=1.0, offset=0.0,
                      block_bytes=None):
    """JAX/Pallas equivalent of Transform(method, scale, offset).forward(x)."""
    if method not in ("none", "identity", "sqrt"):
        raise NotImplementedError(
            "Transformation {} is not supported!".format(method))
    # TODO(synk): tensor-valued (per-channel) scale/offset branch via shape_val
    # is not implemented; only the float scale/offset path is reproduced here.

    orig_shape = x.shape
    orig_dtype = x.dtype
    n = x.size
    if n == 0:
        return x

    default_block_bytes, vmem_limit = _hw_config()
    if block_bytes is None:
        block_bytes = default_block_bytes

    itemsize = jnp.dtype(orig_dtype).itemsize
    params = jnp.array([scale, offset], dtype=jnp.float32)
    kernel = functools.partial(_transform_kernel, method=method,
                               compute_dtype=_compute_dtype(orig_dtype))
    cparams = pltpu.CompilerParams(
        dimension_semantics=("parallel",),
        vmem_limit_bytes=vmem_limit)

    flat = x.reshape(-1)
    cols = next((c for c in _COL_CANDIDATES if n % c == 0), None)

    if cols is not None:
        # Primary path: lane-dense (rows, cols) view, large row blocks.
        x2 = flat.reshape(-1, cols)
        rows = x2.shape[0]
        bytes_per_row = cols * itemsize
        block_rows = max(8, (max(block_bytes // bytes_per_row, 1) // 8) * 8)
        if block_rows >= rows:
            # Keep >= 2 grid steps when possible so the parallel axis can
            # shard across both v7x TensorCores and the pipeline stays alive.
            half = pl.cdiv(rows, 2)
            block_rows = min(rows, ((half + 7) // 8) * 8)
        num_blocks = pl.cdiv(rows, block_rows)

        out2 = pl.pallas_call(
            kernel,
            out_shape=jax.ShapeDtypeStruct(x2.shape, orig_dtype),
            grid=(num_blocks,),
            in_specs=[
                pl.BlockSpec(memory_space=pltpu.MemorySpace.SMEM),      # params
                pl.BlockSpec((block_rows, cols), lambda i: (i, 0)),     # x tile
            ],
            out_specs=pl.BlockSpec((block_rows, cols), lambda i: (i, 0)),
            compiler_params=cparams,
        )(params, x2)
        return out2.reshape(orig_shape)

    # Rare fallback: element count not divisible by 128.  Stream the flat
    # array as a (1, n) view with a masked ragged final lane block — no
    # jnp.pad (which would add a full extra HBM read+write).
    x2 = flat.reshape(1, n)
    block_elems = max(_LANE, (max(block_bytes // itemsize, 1) // 1024) * 1024)
    if block_elems >= n:
        block_elems = n  # full extent block is always legal
    num_blocks = pl.cdiv(n, block_elems)

    out2 = pl.pallas_call(
        kernel,
        out_shape=jax.ShapeDtypeStruct((1, n), orig_dtype),
        grid=(num_blocks,),
        in_specs=[
            pl.BlockSpec(memory_space=pltpu.MemorySpace.SMEM),
            pl.BlockSpec((1, block_elems), lambda i: (0, i)),
        ],
        out_specs=pl.BlockSpec((1, block_elems), lambda i: (0, i)),
        compiler_params=cparams,
    )(params, x2)
    return out2.reshape(orig_shape)


def _reference(x, method, scale, offset):
    y = x.astype(jnp.float32) * scale + offset
    if method == "sqrt":
        y = jnp.sign(y) * jnp.sqrt(jnp.abs(y))
    return y.astype(x.dtype)


if __name__ == "__main__":
    key = jax.random.PRNGKey(0)
    k1, k2, k3 = jax.random.split(key, 3)

    # Shapes consistent with the module's NCHW usage.
    x = jax.random.normal(k1, (2, 4, 16, 16), dtype=jnp.float32)

    # identity transform with affine scale/offset
    y_id = jax.block_until_ready(
        transform_forward(x, method="identity", scale=2.0, offset=0.5))
    ref_id = _reference(x, "identity", 2.0, 0.5)
    assert y_id.shape == x.shape and y_id.dtype == x.dtype
    assert jnp.allclose(y_id, ref_id, atol=1e-6, rtol=1e-6)

    # signed-sqrt transform (f32, bit-splice path)
    y_sq = jax.block_until_ready(
        transform_forward(x, method="sqrt", scale=1.5, offset=-0.25))
    ref_sq = _reference(x, "sqrt", 1.5, -0.25)
    assert y_sq.shape == x.shape and y_sq.dtype == x.dtype
    assert jnp.allclose(y_sq, ref_sq, atol=2e-5, rtol=1e-5)

    # multi-block grid with a ragged final row-block (exercise masking path)
    xr = jax.random.normal(k2, (2, 3, 40, 128), dtype=jnp.float32)
    y_r = jax.block_until_ready(
        transform_forward(xr, method="sqrt", scale=0.7, offset=0.1,
                          block_bytes=64 * 1024))
    ref_r = _reference(xr, "sqrt", 0.7, 0.1)
    assert y_r.shape == xr.shape and y_r.dtype == xr.dtype
    assert jnp.allclose(y_r, ref_r, atol=2e-5, rtol=1e-5)

    # bf16 input (native bf16 compute on v6e/v7x, f32 compute on older chips);
    # offset keeps y away from zero so sqrt stays well-conditioned for compare.
    xb = jax.random.normal(k3, (2, 4, 16, 16), dtype=jnp.bfloat16)
    y_b = jax.block_until_ready(
        transform_forward(xb, method="sqrt", scale=0.25, offset=-5.0))
    ref_b = _reference(xb, "sqrt", 0.25, -5.0)
    assert y_b.shape == xb.shape and y_b.dtype == xb.dtype
    assert jnp.allclose(y_b.astype(jnp.float32), ref_b.astype(jnp.float32),
                        atol=5e-2, rtol=2e-2)

    # element count not divisible by 128 -> no-pad fallback path
    xo = jax.random.normal(k1, (3, 5, 7), dtype=jnp.float32)
    y_o = jax.block_until_ready(
        transform_forward(xo, method="sqrt", scale=0.5, offset=-0.1))
    ref_o = _reference(xo, "sqrt", 0.5, -0.1)
    assert y_o.shape == xo.shape and y_o.dtype == xo.dtype
    assert jnp.allclose(y_o, ref_o, atol=2e-5, rtol=1e-5)

    print("KERNEL_OK")
</pallas_src>

<mosaic_0001>
module attributes {stable_mosaic.version = 11 : i64} {
  func.func @_transform_kernel(%arg0: i32, %arg1: memref<2xf32, #tpu.memory_space<smem>>, %arg2: memref<1x2048xf32, #tpu.memory_space<vmem>>, %arg3: memref<1x2048xf32, #tpu.memory_space<vmem>>) attributes {dimension_semantics = [#tpu.dimension_semantics<parallel>], iteration_bounds = array<i64: 1>, scalar_prefetch = 0 : i64, scratch_operands = 0 : i64, tpu.core_type = #tpu.core_type<tc>, window_params = [{transform_indices = @transform_0, window_bounds = array<i64: 2>}, {transform_indices = @transform_1, window_bounds = array<i64: 1, 2048>}, {transform_indices = @transform_2, window_bounds = array<i64: 1, 2048>}]} {
    %c0 = arith.constant 0 : index
    %0 = memref.load %arg1[%c0] : memref<2xf32, #tpu.memory_space<smem>>
    %c1 = arith.constant 1 : index
    %1 = memref.load %arg1[%c1] : memref<2xf32, #tpu.memory_space<smem>>
    %c0_0 = arith.constant 0 : index
    %c0_1 = arith.constant 0 : index
    %2 = vector.load %arg2[%c0_0, %c0_1] : memref<1x2048xf32, #tpu.memory_space<vmem>>, vector<1x2048xf32>
    %3 = vector.broadcast %0 : f32 to vector<1x2048xf32>
    %4 = arith.mulf %2, %3 : vector<1x2048xf32>
    %5 = vector.broadcast %1 : f32 to vector<1x2048xf32>
    %6 = arith.addf %4, %5 : vector<1x2048xf32>
    %c0_2 = arith.constant 0 : index
    %c0_3 = arith.constant 0 : index
    %7 = vector.load %arg3[%c0_2, %c0_3] : memref<1x2048xf32, #tpu.memory_space<vmem>>, vector<1x2048xf32>
    tpu.vector_store %arg3[%c0_2, %c0_3], %6 {strides = array<i32>} : memref<1x2048xf32, #tpu.memory_space<vmem>>, vector<1x2048xf32>,
    return
  }
  func.func @transform_0(%arg0: i32) -> i32 {
    %c0_i32 = arith.constant 0 : i32
    %c0_i32_0 = arith.constant 0 : i32
    return %c0_i32 : i32
  }
  func.func @transform_1(%arg0: i32) -> (i32, i32) {
    %c0_i32 = arith.constant 0 : i32
    %c0_i32_0 = arith.constant 0 : i32
    return %arg0, %c0_i32 : i32, i32
  }
  func.func @transform_2(%arg0: i32) -> (i32, i32) {
    %c0_i32 = arith.constant 0 : i32
    %c0_i32_0 = arith.constant 0 : i32
    return %arg0, %c0_i32 : i32, i32
  }
}

</mosaic_0001>

<llo_original>
// kernel: tpu_custom_call.1
$region0: #{tpu_custom_call.1}
  #allocation0 [shape = 'u32[]', space=smem, size = 0x4, offset = 0x4, fixed_abs, tag = 'smem constant byte address 0x4 - core index']
  #allocation1 [shape = 'u32[72,128]{1,0:T(1,128)}', space=vmem, size = 0x9000, scoped, tag = 'internal scratch']
  %s0 = inlined_call_operand.hbm [shape: f32[2], index: 0, kind: input, shape index: {}]
  %s1 = inlined_call_operand.hbm [shape: f32[1,2048], index: 1, kind: input, shape index: {}]
  %s2 = inlined_call_operand.hbm [shape: f32[1,2048], index: 2, kind: output, shape index: {}]
  %s3 = sld [smem:[#allocation0]]
  $region26: #{tpu_custom_call.1} parent=0
    _
  %s5 = ssub.s32 1, %s3
  %s6 = scalar_select 0, %s5, %s3
  $region1: #{tpu_custom_call.1} parent=0
    #allocation2 [shape = 'u8[512]{0}', space=smem, size = 0x200, scoped, tag = 'input window, operand 0, single buffered']
    #allocation3 [shape = 's32[1]{0}', space=sflag, size = 0x4, scoped, tag = 'scoped memory for tpu_custom_call.1']
    #allocation4 [shape = 's32[1]{0}', space=sflag, size = 0x4, scoped, tag = 'scoped memory for tpu_custom_call.1']
    #allocation5 [shape = 's32[1]{0}', space=sflag, size = 0x4, scoped, tag = 'scoped memory for tpu_custom_call.1']
    #allocation6 [shape = 'u8[8192]{0}', space=vmem, size = 0x2000, scoped, tag = 'input window, operand 1, single buffered']
    #allocation7 [shape = 'u8[8192]{0}', space=vmem, size = 0x2000, scoped, tag = 'output window, operand 0, single buffered']
    %7 = vsyncpa [#allocation5], 0
    %8 = vsyncpa [#allocation3], 0
    %9 = vsyncpa [#allocation4], 0
    // Predicated region
    $region2: #{tpu_custom_call.1} parent=1 // pred_check
      _
    $region3: #{tpu_custom_call.1} parent=1 // pred_check_branch
      %11 = sbr.rel (0) target = $region5
    $region4: #{tpu_custom_call.1} parent=1 // pred_region
      %13 = vsyncadd [#allocation5], 0
      %s15 = sshll.u32 %s0, 4
      %s16 = int_to_ptr.hbm [resolvable:$true] %s15
      %18 = dma.hbm_to_smem %s16, 16, [#allocation2], [#allocation5]
    $region5: #{tpu_custom_call.1} parent=1 // pred_fallthru
      _
    // Predicated region
    $region6: #{tpu_custom_call.1} parent=1 // pred_check
      _
    $region7: #{tpu_custom_call.1} parent=1 // pred_check_branch
      %20 = sbr.rel (0) target = $region9
    $region8: #{tpu_custom_call.1} parent=1 // pred_region
      %22 = vsyncadd [#allocation3], 0
      %s24 = sshll.u32 %s1, 4
      %s25 = int_to_ptr.hbm [resolvable:$true] %s24
      %s26 = sshll.u32 [#allocation6], 4
      %s27 = int_to_ptr.vmem [resolvable:$true] %s26
      %29 = dma.hbm_to_vmem [thread:$0]  %s25, 256, %s27, [#allocation3]
    $region9: #{tpu_custom_call.1} parent=1 // pred_fallthru
      _
    // Predicated region
    $region10: #{tpu_custom_call.1} parent=1 // pred_check
      _
    $region11: #{tpu_custom_call.1} parent=1 // pred_check_branch
      %31 = sbr.rel (0) target = $region13
    $region12: #{tpu_custom_call.1} parent=1 // pred_region
      %33 = dma.done [#allocation5], 16
    $region13: #{tpu_custom_call.1} parent=1 // pred_fallthru
      _
    // Predicated region
    $region14: #{tpu_custom_call.1} parent=1 // pred_check
      _
    $region15: #{tpu_custom_call.1} parent=1 // pred_check_branch
      %35 = sbr.rel (0) target = $region17
    $region16: #{tpu_custom_call.1} parent=1 // pred_region
      %37 = dma.done [#allocation3], 256
    $region17: #{tpu_custom_call.1} parent=1 // pred_fallthru
      _
    %38 = sfence
    %s39 = sld [smem:[#allocation2]]
    %s40 = sld [smem:[#allocation2 + $0x1]]
    %v41 = vld [vmem:[#allocation6] sm:$0xff]
    %v42 = vld [vmem:[#allocation6 + $0x8] sm:$0xff]
    %v43 = vstv %s39
    %v44 = vmul.f32 %v41, %v43
    %v45 = vmul.f32 %v42, %v43
    %v46 = vstv %s40
    %v47 = vadd.f32 %v44, %v46
    %v48 = vadd.f32 %v45, %v46
    %49 = vst [vmem:[#allocation7] sm:$0xff] %v47
    %50 = vst [vmem:[#allocation7 + $0x8] sm:$0xff] %v48
    // Predicated region
    $region18: #{tpu_custom_call.1} parent=1 // pred_check
      _
    $region19: #{tpu_custom_call.1} parent=1 // pred_check_branch
      %52 = sbr.rel (0) target = $region21
    $region20: #{tpu_custom_call.1} parent=1 // pred_region
      %54 = vsyncadd [#allocation4], 0
      %s56 = sshll.u32 [#allocation7], 4
      %s57 = int_to_ptr.vmem [resolvable:$true] %s56
      %s58 = sshll.u32 %s2, 4
      %s59 = int_to_ptr.hbm [resolvable:$true] %s58
      %61 = dma.vmem_to_hbm [thread:$0]  %s57, 256, %s59, [#allocation4]
    $region21: #{tpu_custom_call.1} parent=1 // pred_fallthru
      _
    // Predicated region
    $region22: #{tpu_custom_call.1} parent=1 // pred_check
      _
    $region23: #{tpu_custom_call.1} parent=1 // pred_check_branch
      %63 = sbr.rel (0) target = $region25
    $region24: #{tpu_custom_call.1} parent=1 // pred_region
      %65 = dma.done [#allocation4], 256
    $region25: #{tpu_custom_call.1} parent=1 // pred_fallthru
      _
    %66 = vsyncpa [#allocation3], 1
    %67 = vsyncpa [#allocation4], 1
    %68 = vsyncpa [#allocation5], 1

</llo_original>
